<compile_context>
chip_gen: v5e
topology: v5e:2x2
jax: 0.10.0
libtpu: 0.0.40
codegen_flags: <defaults>
</compile_context>

<pallas_src>
import functools

import jax
import jax.numpy as jnp
from jax.experimental import pallas as pl
from jax.experimental.pallas import tpu as pltpu


def _round_up(x: int, m: int) -> int:
    return ((x + m - 1) // m) * m


def mlp_kernel(x_ref, w1_ref, b1_ref, w2_ref, b2_ref, w3_ref, b3_ref,
               w4_ref, b4_ref, o_ref, *, compute_dtype):
    # fc1 + bias + ReLU   (dropout == identity in eval mode)
    h = jnp.dot(x_ref[...].astype(compute_dtype), w1_ref[...],
                preferred_element_type=jnp.float32)
    h = jnp.maximum(h + b1_ref[...], 0.0)
    # fc2 + bias + ReLU
    h = jnp.dot(h.astype(compute_dtype), w2_ref[...],
                preferred_element_type=jnp.float32)
    h = jnp.maximum(h + b2_ref[...], 0.0)
    # fc3 + bias + ReLU
    h = jnp.dot(h.astype(compute_dtype), w3_ref[...],
                preferred_element_type=jnp.float32)
    h = jnp.maximum(h + b3_ref[...], 0.0)
    # fc4 (logits, no activation)
    h = jnp.dot(h.astype(compute_dtype), w4_ref[...],
                preferred_element_type=jnp.float32)
    o_ref[...] = (h + b4_ref[...]).astype(o_ref.dtype)


def prepare_params(params, compute_dtype=jnp.bfloat16):
    """Pad every feature dim to a multiple of 128 lanes; weights -> compute dtype.

    Zero padding is exact: padded hidden units get bias 0 -> ReLU 0 -> multiply
    zero weight rows of the next layer, and padded output columns are sliced off.
    """
    prepped = {}
    for i in range(1, 5):
        w = params[f"w{i}"]           # [in, out]
        b = params[f"b{i}"]           # [1, out]
        in_p = _round_up(w.shape[0], 128)
        out_p = _round_up(w.shape[1], 128)
        w = jnp.pad(w, ((0, in_p - w.shape[0]), (0, out_p - w.shape[1])))
        b = jnp.pad(b, ((0, 0), (0, out_p - b.shape[1])))
        prepped[f"w{i}"] = w.astype(compute_dtype)
        prepped[f"b{i}"] = b.astype(jnp.float32)   # bias/ReLU stay f32 (v5e-safe)
    return prepped


@functools.partial(jax.jit,
                   static_argnames=("n_action", "block_b", "compute_dtype"))
def mlp_forward(x, prepped, *, n_action, block_b=256,
                compute_dtype=jnp.bfloat16):
    """x: [B, state_dim] f32. prepped: lane-padded params from prepare_params."""
    B, state_dim = x.shape
    d_in = prepped["w1"].shape[0]
    h_dim = prepped["w1"].shape[1]
    out_pad = prepped["w4"].shape[1]

    # Batch tile: multiple of 8 (f32 sublane), capped at block_b.
    tb = min(block_b, _round_up(B, 8))
    b_pad = _round_up(B, tb)
    x_p = jnp.pad(x.astype(jnp.float32),
                  ((0, b_pad - B), (0, d_in - state_dim)))

    grid = (pl.cdiv(b_pad, tb),)

    def resident(arr):  # weights/biases: same block every grid step -> VMEM-resident
        return pl.BlockSpec(arr.shape, lambda i: (0, 0))

    weights = (prepped["w1"], prepped["b1"], prepped["w2"], prepped["b2"],
               prepped["w3"], prepped["b3"], prepped["w4"], prepped["b4"])

    in_specs = [pl.BlockSpec((tb, d_in), lambda i: (i, 0))]
    in_specs += [resident(a) for a in weights]
    out_specs = pl.BlockSpec((tb, out_pad), lambda i: (i, 0))

    # VMEM budget: double-buffered x/out tiles + resident params + f32 live
    # intermediates + headroom; clamp to 64 MiB so it is valid on v7x.
    param_bytes = sum(int(a.size) * a.dtype.itemsize for a in weights)
    tile_bytes = 2 * (tb * d_in * 4 + tb * out_pad * 4)
    interm_bytes = 4 * tb * max(h_dim, out_pad) * 4
    vmem_limit = int(min(max(2 * param_bytes + tile_bytes + interm_bytes
                             + (2 << 20), 8 << 20), 64 << 20))

    kernel = functools.partial(mlp_kernel, compute_dtype=compute_dtype)
    out_padded = pl.pallas_call(
        kernel,
        out_shape=jax.ShapeDtypeStruct((b_pad, out_pad), jnp.float32),
        grid=grid,
        in_specs=in_specs,
        out_specs=out_specs,
        compiler_params=pltpu.CompilerParams(
            dimension_semantics=("parallel",),
            vmem_limit_bytes=vmem_limit),
    )(x_p, *weights)

    return out_padded[:B, :n_action]


def init_params(key, state_dim, n_action, nb_neurons):
    """PyTorch nn.Linear-style init: U(-1/sqrt(fan_in), 1/sqrt(fan_in))."""
    dims = [(state_dim, nb_neurons),
            (nb_neurons, nb_neurons),
            (nb_neurons, nb_neurons),
            (nb_neurons, n_action)]
    params = {}
    for i, (fan_in, fan_out) in enumerate(dims, start=1):
        key, kw, kb = jax.random.split(key, 3)
        bound = 1.0 / (fan_in ** 0.5)
        # stored as [in, out] so the kernel computes x @ W (== torch x @ W.T)
        params[f"w{i}"] = jax.random.uniform(
            kw, (fan_in, fan_out), jnp.float32, -bound, bound)
        params[f"b{i}"] = jax.random.uniform(
            kb, (1, fan_out), jnp.float32, -bound, bound)
    return params


if __name__ == "__main__":
    state_dim, n_action, nb_neurons = 16, 8, 32
    batch = 24                      # small, but exercises a multi-step batch grid

    key = jax.random.PRNGKey(0)
    key, kx = jax.random.split(key)
    x = jax.random.normal(kx, (batch, state_dim), dtype=jnp.float32)
    params = init_params(key, state_dim, n_action, nb_neurons)

    compute_dtype = jnp.bfloat16
    prepped = prepare_params(params, compute_dtype=compute_dtype)

    out = mlp_forward(x, prepped, n_action=n_action, block_b=8,
                      compute_dtype=compute_dtype)
    jax.block_until_ready(out)

    # Reference: identical math (same lane padding, same bf16 casts, f32 accum).
    d_in = prepped["w1"].shape[0]
    h = jnp.pad(x, ((0, 0), (0, d_in - state_dim)))
    for i in (1, 2, 3):
        h = jnp.maximum(
            jnp.dot(h.astype(compute_dtype), prepped[f"w{i}"],
                    preferred_element_type=jnp.float32) + prepped[f"b{i}"], 0.0)
    ref = (jnp.dot(h.astype(compute_dtype), prepped["w4"],
                   preferred_element_type=jnp.float32)
           + prepped["b4"])[:, :n_action]

    assert out.shape == (batch, n_action)
    assert jnp.allclose(out, ref, atol=1e-4, rtol=1e-4), (
        float(jnp.max(jnp.abs(out - ref))))

    print("KERNEL_OK")
</pallas_src>

<mosaic_0001>
module attributes {stable_mosaic.version = 11 : i64} {
  func.func @mlp_kernel(%arg0: i32, %arg1: memref<8x128xf32, #tpu.memory_space<vmem>>, %arg2: memref<128x128xbf16, #tpu.memory_space<vmem>>, %arg3: memref<1x128xf32, #tpu.memory_space<vmem>>, %arg4: memref<128x128xbf16, #tpu.memory_space<vmem>>, %arg5: memref<1x128xf32, #tpu.memory_space<vmem>>, %arg6: memref<128x128xbf16, #tpu.memory_space<vmem>>, %arg7: memref<1x128xf32, #tpu.memory_space<vmem>>, %arg8: memref<128x128xbf16, #tpu.memory_space<vmem>>, %arg9: memref<1x128xf32, #tpu.memory_space<vmem>>, %arg10: memref<8x128xf32, #tpu.memory_space<vmem>>) attributes {dimension_semantics = [#tpu.dimension_semantics<parallel>], iteration_bounds = array<i64: 3>, scalar_prefetch = 0 : i64, scratch_operands = 0 : i64, tpu.core_type = #tpu.core_type<tc>, window_params = [{transform_indices = @transform_0, window_bounds = array<i64: 8, 128>}, {pipeline_mode = #tpu.pipeline_mode<synchronous>, transform_indices = @transform_1, window_bounds = array<i64: 128, 128>}, {pipeline_mode = #tpu.pipeline_mode<synchronous>, transform_indices = @transform_2, window_bounds = array<i64: 1, 128>}, {pipeline_mode = #tpu.pipeline_mode<synchronous>, transform_indices = @transform_3, window_bounds = array<i64: 128, 128>}, {pipeline_mode = #tpu.pipeline_mode<synchronous>, transform_indices = @transform_4, window_bounds = array<i64: 1, 128>}, {pipeline_mode = #tpu.pipeline_mode<synchronous>, transform_indices = @transform_5, window_bounds = array<i64: 128, 128>}, {pipeline_mode = #tpu.pipeline_mode<synchronous>, transform_indices = @transform_6, window_bounds = array<i64: 1, 128>}, {pipeline_mode = #tpu.pipeline_mode<synchronous>, transform_indices = @transform_7, window_bounds = array<i64: 128, 128>}, {pipeline_mode = #tpu.pipeline_mode<synchronous>, transform_indices = @transform_8, window_bounds = array<i64: 1, 128>}, {transform_indices = @transform_9, window_bounds = array<i64: 8, 128>}]} {
    %c0 = arith.constant 0 : index
    %c0_0 = arith.constant 0 : index
    %0 = vector.load %arg1[%c0, %c0_0] : memref<8x128xf32, #tpu.memory_space<vmem>>, vector<8x128xf32>
    %1 = arith.truncf %0 : vector<8x128xf32> to vector<8x128xbf16>
    %c0_1 = arith.constant 0 : index
    %c0_2 = arith.constant 0 : index
    %2 = vector.load %arg2[%c0_1, %c0_2] : memref<128x128xbf16, #tpu.memory_space<vmem>>, vector<128x128xbf16>
    %cst = arith.constant dense<0.000000e+00> : vector<8x128xf32>
    %3 = tpu.matmul %1, %2, %cst {dimension_numbers = #tpu.dot_dimension_numbers<[1], [0], [0], [1], [0, 0, 1, 1], [], []>} : vector<8x128xbf16>, vector<128x128xbf16>, vector<8x128xf32> -> vector<8x128xf32>
    %c0_3 = arith.constant 0 : index
    %c0_4 = arith.constant 0 : index
    %4 = vector.load %arg3[%c0_3, %c0_4] : memref<1x128xf32, #tpu.memory_space<vmem>>, vector<1x128xf32>
    %5 = vector.broadcast %4 : vector<1x128xf32> to vector<8x128xf32>
    %6 = arith.addf %3, %5 : vector<8x128xf32>
    %cst_5 = arith.constant 0.000000e+00 : f32
    %7 = vector.broadcast %cst_5 : f32 to vector<8x128xf32>
    %8 = arith.maximumf %6, %7 : vector<8x128xf32>
    %9 = arith.truncf %8 : vector<8x128xf32> to vector<8x128xbf16>
    %c0_6 = arith.constant 0 : index
    %c0_7 = arith.constant 0 : index
    %10 = vector.load %arg4[%c0_6, %c0_7] : memref<128x128xbf16, #tpu.memory_space<vmem>>, vector<128x128xbf16>
    %cst_8 = arith.constant dense<0.000000e+00> : vector<8x128xf32>
    %11 = tpu.matmul %9, %10, %cst_8 {dimension_numbers = #tpu.dot_dimension_numbers<[1], [0], [0], [1], [0, 0, 1, 1], [], []>} : vector<8x128xbf16>, vector<128x128xbf16>, vector<8x128xf32> -> vector<8x128xf32>
    %c0_9 = arith.constant 0 : index
    %c0_10 = arith.constant 0 : index
    %12 = vector.load %arg5[%c0_9, %c0_10] : memref<1x128xf32, #tpu.memory_space<vmem>>, vector<1x128xf32>
    %13 = vector.broadcast %12 : vector<1x128xf32> to vector<8x128xf32>
    %14 = arith.addf %11, %13 : vector<8x128xf32>
    %cst_11 = arith.constant 0.000000e+00 : f32
    %15 = vector.broadcast %cst_11 : f32 to vector<8x128xf32>
    %16 = arith.maximumf %14, %15 : vector<8x128xf32>
    %17 = arith.truncf %16 : vector<8x128xf32> to vector<8x128xbf16>
    %c0_12 = arith.constant 0 : index
    %c0_13 = arith.constant 0 : index
    %18 = vector.load %arg6[%c0_12, %c0_13] : memref<128x128xbf16, #tpu.memory_space<vmem>>, vector<128x128xbf16>
    %cst_14 = arith.constant dense<0.000000e+00> : vector<8x128xf32>
    %19 = tpu.matmul %17, %18, %cst_14 {dimension_numbers = #tpu.dot_dimension_numbers<[1], [0], [0], [1], [0, 0, 1, 1], [], []>} : vector<8x128xbf16>, vector<128x128xbf16>, vector<8x128xf32> -> vector<8x128xf32>
    %c0_15 = arith.constant 0 : index
    %c0_16 = arith.constant 0 : index
    %20 = vector.load %arg7[%c0_15, %c0_16] : memref<1x128xf32, #tpu.memory_space<vmem>>, vector<1x128xf32>
    %21 = vector.broadcast %20 : vector<1x128xf32> to vector<8x128xf32>
    %22 = arith.addf %19, %21 : vector<8x128xf32>
    %cst_17 = arith.constant 0.000000e+00 : f32
    %23 = vector.broadcast %cst_17 : f32 to vector<8x128xf32>
    %24 = arith.maximumf %22, %23 : vector<8x128xf32>
    %25 = arith.truncf %24 : vector<8x128xf32> to vector<8x128xbf16>
    %c0_18 = arith.constant 0 : index
    %c0_19 = arith.constant 0 : index
    %26 = vector.load %arg8[%c0_18, %c0_19] : memref<128x128xbf16, #tpu.memory_space<vmem>>, vector<128x128xbf16>
    %cst_20 = arith.constant dense<0.000000e+00> : vector<8x128xf32>
    %27 = tpu.matmul %25, %26, %cst_20 {dimension_numbers = #tpu.dot_dimension_numbers<[1], [0], [0], [1], [0, 0, 1, 1], [], []>} : vector<8x128xbf16>, vector<128x128xbf16>, vector<8x128xf32> -> vector<8x128xf32>
    %c0_21 = arith.constant 0 : index
    %c0_22 = arith.constant 0 : index
    %28 = vector.load %arg9[%c0_21, %c0_22] : memref<1x128xf32, #tpu.memory_space<vmem>>, vector<1x128xf32>
    %29 = vector.broadcast %28 : vector<1x128xf32> to vector<8x128xf32>
    %30 = arith.addf %27, %29 : vector<8x128xf32>
    %c0_23 = arith.constant 0 : index
    %c0_24 = arith.constant 0 : index
    %31 = vector.load %arg10[%c0_23, %c0_24] : memref<8x128xf32, #tpu.memory_space<vmem>>, vector<8x128xf32>
    tpu.vector_store %arg10[%c0_23, %c0_24], %30 {strides = array<i32>} : memref<8x128xf32, #tpu.memory_space<vmem>>, vector<8x128xf32>,
    return
  }
  func.func @transform_0(%arg0: i32) -> (i32, i32) {
    %c0_i32 = arith.constant 0 : i32
    %c0_i32_0 = arith.constant 0 : i32
    return %arg0, %c0_i32 : i32, i32
  }
  func.func @transform_1(%arg0: i32) -> (i32, i32) {
    %c0_i32 = arith.constant 0 : i32
    %c0_i32_0 = arith.constant 0 : i32
    %c0_i32_1 = arith.constant 0 : i32
    return %c0_i32, %c0_i32_0 : i32, i32
  }
  func.func @transform_2(%arg0: i32) -> (i32, i32) {
    %c0_i32 = arith.constant 0 : i32
    %c0_i32_0 = arith.constant 0 : i32
    %c0_i32_1 = arith.constant 0 : i32
    return %c0_i32, %c0_i32_0 : i32, i32
  }
  func.func @transform_3(%arg0: i32) -> (i32, i32) {
    %c0_i32 = arith.constant 0 : i32
    %c0_i32_0 = arith.constant 0 : i32
    %c0_i32_1 = arith.constant 0 : i32
    return %c0_i32, %c0_i32_0 : i32, i32
  }
  func.func @transform_4(%arg0: i32) -> (i32, i32) {
    %c0_i32 = arith.constant 0 : i32
    %c0_i32_0 = arith.constant 0 : i32
    %c0_i32_1 = arith.constant 0 : i32
    return %c0_i32, %c0_i32_0 : i32, i32
  }
  func.func @transform_5(%arg0: i32) -> (i32, i32) {
    %c0_i32 = arith.constant 0 : i32
    %c0_i32_0 = arith.constant 0 : i32
    %c0_i32_1 = arith.constant 0 : i32
    return %c0_i32, %c0_i32_0 : i32, i32
  }
  func.func @transform_6(%arg0: i32) -> (i32, i32) {
    %c0_i32 = arith.constant 0 : i32
    %c0_i32_0 = arith.constant 0 : i32
    %c0_i32_1 = arith.constant 0 : i32
    return %c0_i32, %c0_i32_0 : i32, i32
  }
  func.func @transform_7(%arg0: i32) -> (i32, i32) {
    %c0_i32 = arith.constant 0 : i32
    %c0_i32_0 = arith.constant 0 : i32
    %c0_i32_1 = arith.constant 0 : i32
    return %c0_i32, %c0_i32_0 : i32, i32
  }
  func.func @transform_8(%arg0: i32) -> (i32, i32) {
    %c0_i32 = arith.constant 0 : i32
    %c0_i32_0 = arith.constant 0 : i32
    %c0_i32_1 = arith.constant 0 : i32
    return %c0_i32, %c0_i32_0 : i32, i32
  }
  func.func @transform_9(%arg0: i32) -> (i32, i32) {
    %c0_i32 = arith.constant 0 : i32
    %c0_i32_0 = arith.constant 0 : i32
    return %arg0, %c0_i32 : i32, i32
  }
}

</mosaic_0001>

<llo_original>
// kernel: mlp_forward.1
$region0: #{mlp_forward.1}
  #allocation0 [shape = 'u32[]', space=smem, size = 0x4, offset = 0x4, fixed_abs, tag = 'smem constant byte address 0x4 - core index']
  #allocation1 [shape = 'u32[72,128]{1,0:T(1,128)}', space=vmem, size = 0x9000, scoped, tag = 'internal scratch']
  %s0 = inlined_call_operand.vmem [shape: f32[24,128], index: 0, kind: input, shape index: {}]
  %s1 = inlined_call_operand.vmem [shape: bf16[128,128], index: 1, kind: input, shape index: {}]
  %s2 = inlined_call_operand.vmem [shape: f32[1,128], index: 2, kind: input, shape index: {}]
  %s3 = inlined_call_operand.hbm [shape: bf16[128,128], index: 3, kind: input, shape index: {}]
  %s4 = inlined_call_operand.vmem [shape: f32[1,128], index: 4, kind: input, shape index: {}]
  %s5 = inlined_call_operand.hbm [shape: bf16[128,128], index: 5, kind: input, shape index: {}]
  %s6 = inlined_call_operand.vmem [shape: f32[1,128], index: 6, kind: input, shape index: {}]
  %s7 = inlined_call_operand.hbm [shape: bf16[128,128], index: 7, kind: input, shape index: {}]
  %s8 = inlined_call_operand.vmem [shape: f32[1,128], index: 8, kind: input, shape index: {}]
  %s9 = inlined_call_operand.vmem [shape: f32[24,128], index: 9, kind: output, shape index: {}]
  %s10 = sld [smem:[#allocation0]]
  $region81: #{mlp_forward.1} parent=0
    _
  %s12 = ssub.s32 1, %s10
  %s13 = scalar_select 0, %s12, %s10
  $region1: #{mlp_forward.1} parent=0
    #allocation2 [shape = 'u8[32768]{0}', space=vmem, size = 0x8000, scoped, tag = 'input window, operand 3, single buffered']
    #allocation3 [shape = 's32[2]{0}', space=sflag, size = 0x8, scoped, tag = 'scoped memory for mlp_forward.1']
    #allocation4 [shape = 'u8[32768]{0}', space=vmem, size = 0x8000, scoped, tag = 'input window, operand 5, single buffered']
    #allocation5 [shape = 's32[1]{0}', space=sflag, size = 0x4, scoped, tag = 'scoped memory for mlp_forward.1']
    #allocation6 [shape = 'u8[32768]{0}', space=vmem, size = 0x8000, scoped, tag = 'input window, operand 7, single buffered']
    %14 = vsyncpa [#allocation3], 0
    %15 = vsyncpa [#allocation5], 0
    loop: start=0, step=1, limit=5
    $region2: #{mlp_forward.1} parent=1 // loop_pre_header
      _
    $region3: #{mlp_forward.1} parent=1 // loop_header
      %s17 = sphi 0, %s21
      %p18 = scmp.ge.s32.totalorder %s17, 5
      %s27 = sphi 0, %s29
      %s30 = sphi 0, %s27
      %s31 = sphi 0, %s30
      %s47 = sphi 0, %s31
      %s51 = sphi 0, %s51
      %s53 = sphi 0, %s51
      %s54 = sphi 0, %s53
      %s68 = sphi 0, %s54
      %s72 = sphi 0, %s72
      %s74 = sphi 0, %s72
      %s75 = sphi 0, %s74
      %s89 = sphi 0, %s75
      %s93 = sphi 0, %s93
      %s95 = sphi 0, %s93
      %s96 = sphi 0, %s95
      %s110 = sphi 0, %s96
      %s114 = sphi 0, %s114
      %s116 = sphi 0, %s114
      %s117 = sphi 0, %s116
      %s131 = sphi 0, %s117
      %s135 = sphi 0, %s135
      %s137 = sphi 0, %s135
      %s138 = sphi 0, %s137
      %s152 = sphi 0, %s138
      %s156 = sphi 0, %s156
      %s158 = sphi 0, %s156
      %s159 = sphi 0, %s158
      %s173 = sphi 0, %s159
      %s177 = sphi 0, %s177
      %s179 = sphi 0, %s177
      %s180 = sphi 0, %s179
      %s194 = sphi 0, %s180
      %s198 = sphi 0, %s198
      %s200 = sphi 0, %s198
      %s201 = sphi 0, %s200
      %s215 = sphi 0, %s201
      %s221 = sphi 0, %s223
      %s224 = sphi 0, %s221
      %s225 = sphi 0, %s224
      %s241 = sphi 0, %s225
    $region4: #{mlp_forward.1} parent=1 // loop_header_branch
      %20 = sbr.rel (%p18) target = $region8
    $region5: #{mlp_forward.1} parent=1 // loop_body
      %s22 = ssub.s32 %s17, 1
      %s23 = ssub.s32 %s17, 2
      %s24 = sadd.s32 %s17, 1
      %s25 = ssub.s32 %s17, %s24
      %p26 = scmp.eq.s32.totalorder %s25, 0
      %s28 = sadd.s32 %s27, 1
      %s29 = scalar_select %p26, %s27, %s28
      %p32 = pneg %p26
      %p33 = scmp.eq.s32.totalorder %s17, 2
      %p34 = por %p32, %p33
      %p35 = scmp.ne.s32.totalorder %s27, %s30
      %p36 = scmp.eq.s32.totalorder %s17, 0
      %p37 = por %p35, %p36
      %p38 = scmp.ne.s32.totalorder %s27, %s30
      %p39 = scmp.eq.s32.totalorder %s22, 2
      %p40 = por %p38, %p39
      %p41 = scmp.ne.s32.totalorder %s30, %s31
      %p42 = scmp.eq.s32.totalorder %s22, 0
      %p43 = por %p41, %p42
      %p44 = scmp.ne.s32.totalorder %s30, %s31
      %p45 = scmp.eq.s32.totalorder %s23, 2
      %p46 = por %p44, %p45
      %p48 = scmp.ne.s32.totalorder %s31, %s47
      %p49 = scmp.eq.s32.totalorder %s23, 0
      %p50 = por %p48, %p49
      %s52 = sadd.s32 %s51, 1
      %p55 = scmp.eq.s32.totalorder %s17, 2
      %p56 = scmp.ne.s32.totalorder %s51, %s53
      %p57 = scmp.eq.s32.totalorder %s17, 0
      %p58 = por %p56, %p57
      %p59 = scmp.ne.s32.totalorder %s51, %s53
      %p60 = scmp.eq.s32.totalorder %s22, 2
      %p61 = por %p59, %p60
      %p62 = scmp.ne.s32.totalorder %s53, %s54
      %p63 = scmp.eq.s32.totalorder %s22, 0
      %p64 = por %p62, %p63
      %p65 = scmp.ne.s32.totalorder %s53, %s54
      %p66 = scmp.eq.s32.totalorder %s23, 2
      %p67 = por %p65, %p66
      %p69 = scmp.ne.s32.totalorder %s54, %s68
      %p70 = scmp.eq.s32.totalorder %s23, 0
      %p71 = por %p69, %p70
      %s73 = sadd.s32 %s72, 1
      %p76 = scmp.eq.s32.totalorder %s17, 2
      %p77 = scmp.ne.s32.totalorder %s72, %s74
      %p78 = scmp.eq.s32.totalorder %s17, 0
      %p79 = por %p77, %p78
      %p80 = scmp.ne.s32.totalorder %s72, %s74
      %p81 = scmp.eq.s32.totalorder %s22, 2
      %p82 = por %p80, %p81
      %p83 = scmp.ne.s32.totalorder %s74, %s75
      %p84 = scmp.eq.s32.totalorder %s22, 0
      %p85 = por %p83, %p84
      %p86 = scmp.ne.s32.totalorder %s74, %s75
      %p87 = scmp.eq.s32.totalorder %s23, 2
      %p88 = por %p86, %p87
      %p90 = scmp.ne.s32.totalorder %s75, %s89
      %p91 = scmp.eq.s32.totalorder %s23, 0
      %p92 = por %p90, %p91
      %s94 = sadd.s32 %s93, 1
      %p97 = scmp.eq.s32.totalorder %s17, 2
      %p98 = scmp.ne.s32.totalorder %s93, %s95
      %p99 = scmp.eq.s32.totalorder %s17, 0
      %p100 = por %p98, %p99
      %p101 = scmp.ne.s32.totalorder %s93, %s95
      %p102 = scmp.eq.s32.totalorder %s22, 2
      %p103 = por %p101, %p102
      %p104 = scmp.ne.s32.totalorder %s95, %s96
      %p105 = scmp.eq.s32.totalorder %s22, 0
      %p106 = por %p104, %p105
      %p107 = scmp.ne.s32.totalorder %s95, %s96
      %p108 = scmp.eq.s32.totalorder %s23, 2
      %p109 = por %p107, %p108
      %p111 = scmp.ne.s32.totalorder %s96, %s110
      %p112 = scmp.eq.s32.totalorder %s23, 0
      %p113 = por %p111, %p112
      %s115 = sadd.s32 %s114, 1
      %p118 = scmp.eq.s32.totalorder %s17, 2
      %p119 = scmp.ne.s32.totalorder %s114, %s116
      %p120 = scmp.eq.s32.totalorder %s17, 0
      %p121 = por %p119, %p120
      %p122 = scmp.ne.s32.totalorder %s114, %s116
      %p123 = scmp.eq.s32.totalorder %s22, 2
      %p124 = por %p122, %p123
      %p125 = scmp.ne.s32.totalorder %s116, %s117
      %p126 = scmp.eq.s32.totalorder %s22, 0
      %p127 = por %p125, %p126
      %p128 = scmp.ne.s32.totalorder %s116, %s117
      %p129 = scmp.eq.s32.totalorder %s23, 2
      %p130 = por %p128, %p129
      %p132 = scmp.ne.s32.totalorder %s117, %s131
      %p133 = scmp.eq.s32.totalorder %s23, 0
      %p134 = por %p132, %p133
      %s136 = sadd.s32 %s135, 1
      %p139 = scmp.eq.s32.totalorder %s17, 2
      %p140 = scmp.ne.s32.totalorder %s135, %s137
      %p141 = scmp.eq.s32.totalorder %s17, 0
      %p142 = por %p140, %p141
      %p143 = scmp.ne.s32.totalorder %s135, %s137
      %p144 = scmp.eq.s32.totalorder %s22, 2
      %p145 = por %p143, %p144
      %p146 = scmp.ne.s32.totalorder %s137, %s138
      %p147 = scmp.eq.s32.totalorder %s22, 0
      %p148 = por %p146, %p147
      %p149 = scmp.ne.s32.totalorder %s137, %s138
      %p150 = scmp.eq.s32.totalorder %s23, 2
      %p151 = por %p149, %p150
      %p153 = scmp.ne.s32.totalorder %s138, %s152
      %p154 = scmp.eq.s32.totalorder %s23, 0
      %p155 = por %p153, %p154
      %s157 = sadd.s32 %s156, 1
      %p160 = scmp.eq.s32.totalorder %s17, 2
      %p161 = scmp.ne.s32.totalorder %s156, %s158
      %p162 = scmp.eq.s32.totalorder %s17, 0
      %p163 = por %p161, %p162
      %p164 = scmp.ne.s32.totalorder %s156, %s158
      %p165 = scmp.eq.s32.totalorder %s22, 2
      %p166 = por %p164, %p165
      %p167 = scmp.ne.s32.totalorder %s158, %s159
      %p168 = scmp.eq.s32.totalorder %s22, 0
      %p169 = por %p167, %p168
      %p170 = scmp.ne.s32.totalorder %s158, %s159
      %p171 = scmp.eq.s32.totalorder %s23, 2
      %p172 = por %p170, %p171
      %p174 = scmp.ne.s32.totalorder %s159, %s173
      %p175 = scmp.eq.s32.totalorder %s23, 0
      %p176 = por %p174, %p175
      %s178 = sadd.s32 %s177, 1
      %p181 = scmp.eq.s32.totalorder %s17, 2
      %p182 = scmp.ne.s32.totalorder %s177, %s179
      %p183 = scmp.eq.s32.totalorder %s17, 0
      %p184 = por %p182, %p183
      %p185 = scmp.ne.s32.totalorder %s177, %s179
      %p186 = scmp.eq.s32.totalorder %s22, 2
      %p187 = por %p185, %p186
      %p188 = scmp.ne.s32.totalorder %s179, %s180
      %p189 = scmp.eq.s32.totalorder %s22, 0
      %p190 = por %p188, %p189
      %p191 = scmp.ne.s32.totalorder %s179, %s180
      %p192 = scmp.eq.s32.totalorder %s23, 2
      %p193 = por %p191, %p192
      %p195 = scmp.ne.s32.totalorder %s180, %s194
      %p196 = scmp.eq.s32.totalorder %s23, 0
      %p197 = por %p195, %p196
      %s199 = sadd.s32 %s198, 1
      %p202 = scmp.eq.s32.totalorder %s17, 2
      %p203 = scmp.ne.s32.totalorder %s198, %s200
      %p204 = scmp.eq.s32.totalorder %s17, 0
      %p205 = por %p203, %p204
      %p206 = scmp.ne.s32.totalorder %s198, %s200
      %p207 = scmp.eq.s32.totalorder %s22, 2
      %p208 = por %p206, %p207
      %p209 = scmp.ne.s32.totalorder %s200, %s201
      %p210 = scmp.eq.s32.totalorder %s22, 0
      %p211 = por %p209, %p210
      %p212 = scmp.ne.s32.totalorder %s200, %s201
      %p213 = scmp.eq.s32.totalorder %s23, 2
      %p214 = por %p212, %p213
      %p216 = scmp.ne.s32.totalorder %s201, %s215
      %p217 = scmp.eq.s32.totalorder %s23, 0
      %p218 = por %p216, %p217
      %s219 = ssub.s32 %s17, %s24
      %p220 = scmp.eq.s32.totalorder %s219, 0
      %s222 = sadd.s32 %s221, 1
      %s223 = scalar_select %p220, %s221, %s222
      %p226 = pneg %p220
      %p227 = scmp.eq.s32.totalorder %s17, 2
      %p228 = por %p226, %p227
      %p229 = scmp.ne.s32.totalorder %s221, %s224
      %p230 = scmp.eq.s32.totalorder %s17, 0
      %p231 = por %p229, %p230
      %p232 = scmp.ne.s32.totalorder %s221, %s224
      %p233 = scmp.eq.s32.totalorder %s22, 2
      %p234 = por %p232, %p233
      %p235 = scmp.ne.s32.totalorder %s224, %s225
      %p236 = scmp.eq.s32.totalorder %s22, 0
      %p237 = por %p235, %p236
      %p238 = scmp.ne.s32.totalorder %s224, %s225
      %p239 = scmp.eq.s32.totalorder %s23, 2
      %p240 = por %p238, %p239
      %p242 = scmp.ne.s32.totalorder %s225, %s241
      %p243 = scmp.eq.s32.totalorder %s23, 0
      %p244 = por %p242, %p243
      %p245 = scmp.le.s32.totalorder 1, %s17
      %p246 = scmp.lt.s32.totalorder %s17, 4
      %p247 = pnand %p245, %p246
      %p248 = pneg %p247
      // Predicated region
      $region9: #{mlp_forward.1} parent=5 // pred_check
        _
      $region10: #{mlp_forward.1} parent=5 // pred_check_branch
        %250 = sbr.rel (%p247) target = $region12
      $region11: #{mlp_forward.1} parent=5 // pred_region
        %s251 = ssub.s32 %s17, 1
        // Predicated region
        $region13: #{mlp_forward.1} parent=11 // pred_check
          %p252 = pneg %p64
        $region14: #{mlp_forward.1} parent=11 // pred_check_branch
          %254 = sbr.rel (%p252) target = $region16
        $region15: #{mlp_forward.1} parent=11 // pred_region
          _
        $region16: #{mlp_forward.1} parent=11 // pred_fallthru
          _
        // Predicated region
        $region17: #{mlp_forward.1} parent=11 // pred_check
          %p255 = pneg %p85
        $region18: #{mlp_forward.1} parent=11 // pred_check_branch
          %257 = sbr.rel (%p255) target = $region20
        $region19: #{mlp_forward.1} parent=11 // pred_region
          _
        $region20: #{mlp_forward.1} parent=11 // pred_fallthru
          _
        // Predicated region
        $region21: #{mlp_forward.1} parent=11 // pred_check
          %p258 = pneg %p106
        $region22: #{mlp_forward.1} parent=11 // pred_check_branch
          %260 = sbr.rel (%p258) target = $region24
        $region23: #{mlp_forward.1} parent=11 // pred_region
          %262 = vsyncadd [#allocation3], 0
          %s263 = sshll.u32 %s3, 4
          %s264 = int_to_ptr.hbm [resolvable:$true] %s263
          %s265 = sshll.u32 [#allocation2], 4
          %s266 = int_to_ptr.vmem [resolvable:$true] %s265
          %271 = dma.hbm_to_vmem [thread:$0]  %s264, 1024, %s266, [#allocation3], 64, 64, 4
        $region24: #{mlp_forward.1} parent=11 // pred_fallthru
          _
        // Predicated region
        $region25: #{mlp_forward.1} parent=11 // pred_check
          %p272 = pneg %p127
        $region26: #{mlp_forward.1} parent=11 // pred_check_branch
          %274 = sbr.rel (%p272) target = $region28
        $region27: #{mlp_forward.1} parent=11 // pred_region
          _
        $region28: #{mlp_forward.1} parent=11 // pred_fallthru
          _
        // Predicated region
        $region29: #{mlp_forward.1} parent=11 // pred_check
          %p275 = pneg %p148
        $region30: #{mlp_forward.1} parent=11 // pred_check_branch
          %277 = sbr.rel (%p275) target = $region32
        $region31: #{mlp_forward.1} parent=11 // pred_region
          %279 = vsyncadd [#allocation5], 0
          %s280 = sshll.u32 %s5, 4
          %s281 = int_to_ptr.hbm [resolvable:$true] %s280
          %s282 = sshll.u32 [#allocation4], 4
          %s283 = int_to_ptr.vmem [resolvable:$true] %s282
          %288 = dma.hbm_to_vmem [thread:$0]  %s281, 1024, %s283, [#allocation5], 64, 64, 4
        $region32: #{mlp_forward.1} parent=11 // pred_fallthru
          _
        // Predicated region
        $region33: #{mlp_forward.1} parent=11 // pred_check
          %p289 = pneg %p169
        $region34: #{mlp_forward.1} parent=11 // pred_check_branch
          %291 = sbr.rel (%p289) target = $region36
        $region35: #{mlp_forward.1} parent=11 // pred_region
          _
        $region36: #{mlp_forward.1} parent=11 // pred_fallthru
          _
        // Predicated region
        $region37: #{mlp_forward.1} parent=11 // pred_check
          %p292 = pneg %p190
        $region38: #{mlp_forward.1} parent=11 // pred_check_branch
          %294 = sbr.rel (%p292) target = $region40
        $region39: #{mlp_forward.1} parent=11 // pred_region
          %296 = vsyncadd [#allocation5], 0
          %s297 = sshll.u32 %s7, 4
          %s298 = int_to_ptr.hbm [resolvable:$true] %s297
          %s299 = sshll.u32 [#allocation6], 4
          %s300 = int_to_ptr.vmem [resolvable:$true] %s299
          %305 = dma.hbm_to_vmem [thread:$0]  %s298, 1024, %s300, [#allocation5], 64, 64, 4
        $region40: #{mlp_forward.1} parent=11 // pred_fallthru
          _
        // Predicated region
        $region41: #{mlp_forward.1} parent=11 // pred_check
          %p306 = pneg %p211
        $region42: #{mlp_forward.1} parent=11 // pred_check_branch
          %308 = sbr.rel (%p306) target = $region44
        $region43: #{mlp_forward.1} parent=11 // pred_region
          _
        $region44: #{mlp_forward.1} parent=11 // pred_fallthru
          _
      $region12: #{mlp_forward.1} parent=5 // pred_fallthru
        _
      %p309 = scmp.lt.s32.totalorder %s17, 3
      // Predicated region
      $region45: #{mlp_forward.1} parent=5 // pred_check
        %p310 = pneg %p309
      $region46: #{mlp_forward.1} parent=5 // pred_check_branch
        %312 = sbr.rel (%p310) target = $region48
      $region47: #{mlp_forward.1} parent=5 // pred_region
        // Predicated region
        $region49: #{mlp_forward.1} parent=47 // pred_check
          %p313 = pneg %p37
        $region50: #{mlp_forward.1} parent=47 // pred_check_branch
          %315 = sbr.rel (%p313) target = $region52
        $region51: #{mlp_forward.1} parent=47 // pred_region
          %p316 = scmp.lt.s32.totalorder %s17, 2
          %s317 = scalar_select %p316, %s17, 2
          %s318 = smul.addr %s317, 8
          %s319 = scalar_lea.vmem %s0, %s318
        $region52: #{mlp_forward.1} parent=47 // pred_fallthru
          _
      $region48: #{mlp_forward.1} parent=5 // pred_fallthru
        _
      %p320 = scmp.le.s32.totalorder 1, %s17
      %p321 = scmp.lt.s32.totalorder %s17, 4
      %p322 = pnand %p320, %p321
      %p323 = pneg %p322
      // Predicated region
      $region53: #{mlp_forward.1} parent=5 // pred_check
        _
      $region54: #{mlp_forward.1} parent=5 // pred_check_branch
        %325 = sbr.rel (%p322) target = $region56
      $region55: #{mlp_forward.1} parent=5 // pred_region
        %s326 = ssub.s32 %s17, 1
        // Predicated region
        $region57: #{mlp_forward.1} parent=55 // pred_check
          %p327 = pneg %p106
        $region58: #{mlp_forward.1} parent=55 // pred_check_branch
          %329 = sbr.rel (%p327) target = $region60
        $region59: #{mlp_forward.1} parent=55 // pred_region
          %331 = dma.done [#allocation3], 1024
        $region60: #{mlp_forward.1} parent=55 // pred_fallthru
          _
        // Predicated region
        $region61: #{mlp_forward.1} parent=55 // pred_check
          %p332 = pneg %p148
        $region62: #{mlp_forward.1} parent=55 // pred_check_branch
          %334 = sbr.rel (%p332) target = $region64
        $region63: #{mlp_forward.1} parent=55 // pred_region
          %336 = dma.done [#allocation5], 1024
        $region64: #{mlp_forward.1} parent=55 // pred_fallthru
          _
        // Predicated region
        $region65: #{mlp_forward.1} parent=55 // pred_check
          %p337 = pneg %p190
        $region66: #{mlp_forward.1} parent=55 // pred_check_branch
          %339 = sbr.rel (%p337) target = $region68
        $region67: #{mlp_forward.1} parent=55 // pred_region
          %341 = dma.done [#allocation5], 1024
        $region68: #{mlp_forward.1} parent=55 // pred_fallthru
          _
        %p342 = scmp.lt.s32.totalorder %s22, 2
        %s343 = scalar_select %p342, %s22, 2
        %s344 = smul.addr %s343, 8
        %s345 = scalar_lea.vmem %s0, %s344
        %p346 = pneg %p43
        %p347 = pneg %p40
        %p348 = pneg %p64
        %p349 = pneg %p61
        %p350 = pneg %p85
        %p351 = pneg %p82
        %p352 = pneg %p106
        %p353 = pneg %p103
        %p354 = pneg %p127
        %p355 = pneg %p124
        %p356 = pneg %p148
        %p357 = pneg %p145
        %p358 = pneg %p169
        %p359 = pneg %p166
        %p360 = pneg %p190
        %p361 = pneg %p187
        %p362 = pneg %p211
        %p363 = pneg %p208
        %p364 = pneg %p237
        %p365 = pneg %p234
        %p366 = scmp.lt.s32.totalorder %s22, 2
        %s367 = scalar_select %p366, %s22, 2
        %s368 = smul.addr %s367, 8
        %s369 = scalar_lea.vmem %s9, %s368
        %p370 = scmp.lt.s32.totalorder %s22, 2
        %s371 = scalar_select %p370, %s22, 2
        %s372 = smul.addr %s371, 8
        %s373 = scalar_lea.vmem %s0, %s372
        %p374 = scmp.lt.s32.totalorder %s22, 2
        %s375 = scalar_select %p374, %s22, 2
        %s376 = smul.addr %s375, 8
        %s377 = scalar_lea.vmem %s9, %s376
        %v378 = vld [vmem:[%s373] sm:$0xff]
        %v379 = vpack.c.bf16 %v378, %v378
        %v380 = vld [vmem:[%s1] sm:$0xf]
        %v381 = vld [vmem:[%s1 + $0x4] sm:$0xf]
        %v382 = vld [vmem:[%s1 + $0x8] sm:$0xf]
        %v383 = vld [vmem:[%s1 + $0xc] sm:$0xf]
        %v384 = vld [vmem:[%s1 + $0x10] sm:$0xf]
        %v385 = vld [vmem:[%s1 + $0x14] sm:$0xf]
        %v386 = vld [vmem:[%s1 + $0x18] sm:$0xf]
        %v387 = vld [vmem:[%s1 + $0x1c] sm:$0xf]
        %v388 = vld [vmem:[%s1 + $0x20] sm:$0xf]
        %v389 = vld [vmem:[%s1 + $0x24] sm:$0xf]
        %v390 = vld [vmem:[%s1 + $0x28] sm:$0xf]
        %v391 = vld [vmem:[%s1 + $0x2c] sm:$0xf]
        %v392 = vld [vmem:[%s1 + $0x30] sm:$0xf]
        %v393 = vld [vmem:[%s1 + $0x34] sm:$0xf]
        %v394 = vld [vmem:[%s1 + $0x38] sm:$0xf]
        %v395 = vld [vmem:[%s1 + $0x3c] sm:$0xf]
        %v396 = vld [vmem:[%s2] sm:$0x1]
        %v398 = vperm.slane %v396, 0
        %v416 = vunpack.c.l.b16 %v380
        %v417 = vunpack.c.l.b16 %v381
        %v418 = vunpack.c.l.b16 %v382
        %v419 = vunpack.c.l.b16 %v383
        %v420 = vunpack.c.l.b16 %v384
        %v421 = vunpack.c.l.b16 %v385
        %v422 = vunpack.c.l.b16 %v386
        %v423 = vunpack.c.l.b16 %v387
        %v424 = vunpack.c.l.b16 %v388
        %v425 = vunpack.c.l.b16 %v389
        %v426 = vunpack.c.l.b16 %v390
        %v427 = vunpack.c.l.b16 %v391
        %v428 = vunpack.c.l.b16 %v392
        %v429 = vunpack.c.l.b16 %v393
        %v430 = vunpack.c.l.b16 %v394
        %v431 = vunpack.c.l.b16 %v395
        %v432 = vpack.c.b16 %v417, %v416
        %v433 = vpack.c.b16 %v419, %v418
        %v434 = vpack.c.b16 %v421, %v420
        %v435 = vpack.c.b16 %v423, %v422
        %v436 = vpack.c.b16 %v425, %v424
        %v437 = vpack.c.b16 %v427, %v426
        %v438 = vpack.c.b16 %v429, %v428
        %v439 = vpack.c.b16 %v431, %v430
        %448 = vmatpush.bf16.msra.mxu0 %v439
        %449 = vmatpush.bf16.msra.mxu0 %v438
        %450 = vmatpush.bf16.msra.mxu0 %v437
        %451 = vmatpush.bf16.msra.mxu0 %v436
        %452 = vmatpush.bf16.msra.mxu0 %v435
        %453 = vmatpush.bf16.msra.mxu0 %v434
        %454 = vmatpush.bf16.msra.mxu0 %v433
        %455 = vmatpush.bf16.msra.mxu0 %v432
        %456 = vmatmul.bf16.gmra.mxu0 %v379
        %v457 = vpop.f32.mrf.mxu0
        %v458 = vadd.f32 %v398, %v457
        %v459 = vpop.f32.mrf.mxu0
        %460 = vdwg.mxu0
        %v461 = vmax.f32 %v458, 0.0
        %v462 = vpack.c.bf16 %v461, %v461
        %v463 = vld [vmem:[#allocation2] sm:$0xf]
        %v464 = vld [vmem:[#allocation2 + $0x4] sm:$0xf]
        %v465 = vld [vmem:[#allocation2 + $0x8] sm:$0xf]
        %v466 = vld [vmem:[#allocation2 + $0xc] sm:$0xf]
        %v467 = vld [vmem:[#allocation2 + $0x10] sm:$0xf]
        %v468 = vld [vmem:[#allocation2 + $0x14] sm:$0xf]
        %v469 = vld [vmem:[#allocation2 + $0x18] sm:$0xf]
        %v470 = vld [vmem:[#allocation2 + $0x1c] sm:$0xf]
        %v471 = vld [vmem:[#allocation2 + $0x20] sm:$0xf]
        %v472 = vld [vmem:[#allocation2 + $0x24] sm:$0xf]
        %v473 = vld [vmem:[#allocation2 + $0x28] sm:$0xf]
        %v474 = vld [vmem:[#allocation2 + $0x2c] sm:$0xf]
        %v475 = vld [vmem:[#allocation2 + $0x30] sm:$0xf]
        %v476 = vld [vmem:[#allocation2 + $0x34] sm:$0xf]
        %v477 = vld [vmem:[#allocation2 + $0x38] sm:$0xf]
        %v478 = vld [vmem:[#allocation2 + $0x3c] sm:$0xf]
        %v479 = vld [vmem:[%s4] sm:$0x1]
        %v481 = vperm.slane %v479, 0
        %v499 = vunpack.c.l.b16 %v463
        %v500 = vunpack.c.l.b16 %v464
        %v501 = vunpack.c.l.b16 %v465
        %v502 = vunpack.c.l.b16 %v466
        %v503 = vunpack.c.l.b16 %v467
        %v504 = vunpack.c.l.b16 %v468
        %v505 = vunpack.c.l.b16 %v469
        %v506 = vunpack.c.l.b16 %v470
        %v507 = vunpack.c.l.b16 %v471
        %v508 = vunpack.c.l.b16 %v472
        %v509 = vunpack.c.l.b16 %v473
        %v510 = vunpack.c.l.b16 %v474
        %v511 = vunpack.c.l.b16 %v475
        %v512 = vunpack.c.l.b16 %v476
        %v513 = vunpack.c.l.b16 %v477
        %v514 = vunpack.c.l.b16 %v478
        %v515 = vpack.c.b16 %v500, %v499
        %v516 = vpack.c.b16 %v502, %v501
        %v517 = vpack.c.b16 %v504, %v503
        %v518 = vpack.c.b16 %v506, %v505
        %v519 = vpack.c.b16 %v508, %v507
        %v520 = vpack.c.b16 %v510, %v509
        %v521 = vpack.c.b16 %v512, %v511
        %v522 = vpack.c.b16 %v514, %v513
        %531 = vmatpush.bf16.msra.mxu0 %v522
        %532 = vmatpush.bf16.msra.mxu0 %v521
        %533 = vmatpush.bf16.msra.mxu0 %v520
        %534 = vmatpush.bf16.msra.mxu0 %v519
        %535 = vmatpush.bf16.msra.mxu0 %v518
        %536 = vmatpush.bf16.msra.mxu0 %v517
        %537 = vmatpush.bf16.msra.mxu0 %v516
        %538 = vmatpush.bf16.msra.mxu0 %v515
        %539 = vmatmul.bf16.gmra.mxu0 %v462
        %v540 = vpop.f32.mrf.mxu0
        %v541 = vadd.f32 %v481, %v540
        %v542 = vpop.f32.mrf.mxu0
        %543 = vdwg.mxu0
        %v544 = vmax.f32 %v541, 0.0
        %v545 = vpack.c.bf16 %v544, %v544
        %v546 = vld [vmem:[#allocation4] sm:$0xf]
        %v547 = vld [vmem:[#allocation4 + $0x4] sm:$0xf]
        %v548 = vld [vmem:[#allocation4 + $0x8] sm:$0xf]
        %v549 = vld [vmem:[#allocation4 + $0xc] sm:$0xf]
        %v550 = vld [vmem:[#allocation4 + $0x10] sm:$0xf]
        %v551 = vld [vmem:[#allocation4 + $0x14] sm:$0xf]
        %v552 = vld [vmem:[#allocation4 + $0x18] sm:$0xf]
        %v553 = vld [vmem:[#allocation4 + $0x1c] sm:$0xf]
        %v554 = vld [vmem:[#allocation4 + $0x20] sm:$0xf]
        %v555 = vld [vmem:[#allocation4 + $0x24] sm:$0xf]
        %v556 = vld [vmem:[#allocation4 + $0x28] sm:$0xf]
        %v557 = vld [vmem:[#allocation4 + $0x2c] sm:$0xf]
        %v558 = vld [vmem:[#allocation4 + $0x30] sm:$0xf]
        %v559 = vld [vmem:[#allocation4 + $0x34] sm:$0xf]
        %v560 = vld [vmem:[#allocation4 + $0x38] sm:$0xf]
        %v561 = vld [vmem:[#allocation4 + $0x3c] sm:$0xf]
        %v562 = vld [vmem:[%s6] sm:$0x1]
        %v564 = vperm.slane %v562, 0
        %v582 = vunpack.c.l.b16 %v546
        %v583 = vunpack.c.l.b16 %v547
        %v584 = vunpack.c.l.b16 %v548
        %v585 = vunpack.c.l.b16 %v549
        %v586 = vunpack.c.l.b16 %v550
        %v587 = vunpack.c.l.b16 %v551
        %v588 = vunpack.c.l.b16 %v552
        %v589 = vunpack.c.l.b16 %v553
        %v590 = vunpack.c.l.b16 %v554
        %v591 = vunpack.c.l.b16 %v555
        %v592 = vunpack.c.l.b16 %v556
        %v593 = vunpack.c.l.b16 %v557
        %v594 = vunpack.c.l.b16 %v558
        %v595 = vunpack.c.l.b16 %v559
        %v596 = vunpack.c.l.b16 %v560
        %v597 = vunpack.c.l.b16 %v561
        %v598 = vpack.c.b16 %v583, %v582
        %v599 = vpack.c.b16 %v585, %v584
        %v600 = vpack.c.b16 %v587, %v586
        %v601 = vpack.c.b16 %v589, %v588
        %v602 = vpack.c.b16 %v591, %v590
        %v603 = vpack.c.b16 %v593, %v592
        %v604 = vpack.c.b16 %v595, %v594
        %v605 = vpack.c.b16 %v597, %v596
        %614 = vmatpush.bf16.msra.mxu0 %v605
        %615 = vmatpush.bf16.msra.mxu0 %v604
        %616 = vmatpush.bf16.msra.mxu0 %v603
        %617 = vmatpush.bf16.msra.mxu0 %v602
        %618 = vmatpush.bf16.msra.mxu0 %v601
        %619 = vmatpush.bf16.msra.mxu0 %v600
        %620 = vmatpush.bf16.msra.mxu0 %v599
        %621 = vmatpush.bf16.msra.mxu0 %v598
        %622 = vmatmul.bf16.gmra.mxu0 %v545
        %v623 = vpop.f32.mrf.mxu0
        %v624 = vadd.f32 %v564, %v623
        %v625 = vpop.f32.mrf.mxu0
        %626 = vdwg.mxu0
        %v627 = vmax.f32 %v624, 0.0
        %v628 = vpack.c.bf16 %v627, %v627
        %v629 = vld [vmem:[#allocation6] sm:$0xf]
        %v630 = vld [vmem:[#allocation6 + $0x4] sm:$0xf]
        %v631 = vld [vmem:[#allocation6 + $0x8] sm:$0xf]
        %v632 = vld [vmem:[#allocation6 + $0xc] sm:$0xf]
        %v633 = vld [vmem:[#allocation6 + $0x10] sm:$0xf]
        %v634 = vld [vmem:[#allocation6 + $0x14] sm:$0xf]
        %v635 = vld [vmem:[#allocation6 + $0x18] sm:$0xf]
        %v636 = vld [vmem:[#allocation6 + $0x1c] sm:$0xf]
        %v637 = vld [vmem:[#allocation6 + $0x20] sm:$0xf]
        %v638 = vld [vmem:[#allocation6 + $0x24] sm:$0xf]
        %v639 = vld [vmem:[#allocation6 + $0x28] sm:$0xf]
        %v640 = vld [vmem:[#allocation6 + $0x2c] sm:$0xf]
        %v641 = vld [vmem:[#allocation6 + $0x30] sm:$0xf]
        %v642 = vld [vmem:[#allocation6 + $0x34] sm:$0xf]
        %v643 = vld [vmem:[#allocation6 + $0x38] sm:$0xf]
        %v644 = vld [vmem:[#allocation6 + $0x3c] sm:$0xf]
        %v645 = vld [vmem:[%s8] sm:$0x1]
        %v647 = vperm.slane %v645, 0
        %v665 = vunpack.c.l.b16 %v629
        %v666 = vunpack.c.l.b16 %v630
        %v667 = vunpack.c.l.b16 %v631
        %v668 = vunpack.c.l.b16 %v632
        %v669 = vunpack.c.l.b16 %v633
        %v670 = vunpack.c.l.b16 %v634
        %v671 = vunpack.c.l.b16 %v635
        %v672 = vunpack.c.l.b16 %v636
        %v673 = vunpack.c.l.b16 %v637
        %v674 = vunpack.c.l.b16 %v638
        %v675 = vunpack.c.l.b16 %v639
        %v676 = vunpack.c.l.b16 %v640
        %v677 = vunpack.c.l.b16 %v641
        %v678 = vunpack.c.l.b16 %v642
        %v679 = vunpack.c.l.b16 %v643
        %v680 = vunpack.c.l.b16 %v644
        %v681 = vpack.c.b16 %v666, %v665
        %v682 = vpack.c.b16 %v668, %v667
        %v683 = vpack.c.b16 %v670, %v669
        %v684 = vpack.c.b16 %v672, %v671
        %v685 = vpack.c.b16 %v674, %v673
        %v686 = vpack.c.b16 %v676, %v675
        %v687 = vpack.c.b16 %v678, %v677
        %v688 = vpack.c.b16 %v680, %v679
        %697 = vmatpush.bf16.msra.mxu0 %v688
        %698 = vmatpush.bf16.msra.mxu0 %v687
        %699 = vmatpush.bf16.msra.mxu0 %v686
        %700 = vmatpush.bf16.msra.mxu0 %v685
        %701 = vmatpush.bf16.msra.mxu0 %v684
        %702 = vmatpush.bf16.msra.mxu0 %v683
        %703 = vmatpush.bf16.msra.mxu0 %v682
        %704 = vmatpush.bf16.msra.mxu0 %v681
        %705 = vmatmul.bf16.gmra.mxu0 %v628
        %v706 = vpop.f32.mrf.mxu0
        %v707 = vadd.f32 %v647, %v706
        %v708 = vpop.f32.mrf.mxu0
        %709 = vdwg.mxu0
        %710 = vst [vmem:[%s377] sm:$0xff] %v707
        %p711 = scmp.lt.s32.totalorder %s22, 2
        %s712 = scalar_select %p711, %s22, 2
        %s713 = smul.addr %s712, 8
        %s714 = scalar_lea.vmem %s9, %s713
        // Predicated region
        $region69: #{mlp_forward.1} parent=55 // pred_check
          %p715 = pneg %p234
        $region70: #{mlp_forward.1} parent=55 // pred_check_branch
          %717 = sbr.rel (%p715) target = $region72
        $region71: #{mlp_forward.1} parent=55 // pred_region
          _
        $region72: #{mlp_forward.1} parent=55 // pred_fallthru
          _
      $region56: #{mlp_forward.1} parent=5 // pred_fallthru
        _
      %p718 = scmp.le.s32.totalorder 2, %s17
      // Predicated region
      $region73: #{mlp_forward.1} parent=5 // pred_check
        %p719 = pneg %p718
      $region74: #{mlp_forward.1} parent=5 // pred_check_branch
        %721 = sbr.rel (%p719) target = $region76
      $region75: #{mlp_forward.1} parent=5 // pred_region
        %s722 = ssub.s32 %s17, 2
        // Predicated region
        $region77: #{mlp_forward.1} parent=75 // pred_check
          %p723 = pneg %p240
        $region78: #{mlp_forward.1} parent=75 // pred_check_branch
          %725 = sbr.rel (%p723) target = $region80
        $region79: #{mlp_forward.1} parent=75 // pred_region
          %p726 = scmp.lt.s32.totalorder %s23, 2
          %s727 = scalar_select %p726, %s23, 2
          %s728 = smul.addr %s727, 8
          %s729 = scalar_lea.vmem %s9, %s728
        $region80: #{mlp_forward.1} parent=75 // pred_fallthru
          _
      $region76: #{mlp_forward.1} parent=5 // pred_fallthru
        _
    $region6: #{mlp_forward.1} parent=1 // loop_footer
      %s21 = sadd.s32 1, %s17
    $region7: #{mlp_forward.1} parent=1 // loop_footer_branch
      %16 = sbr.rel target = $region3
    $region8: #{mlp_forward.1} parent=1 // loop_exit
      _
    %730 = vsyncpa [#allocation3], 1
    %s731 = scalar_lea.sflag [#allocation3], 1
    %732 = vsyncpa %s731, 1
    %733 = vsyncpa [#allocation5], 1

</llo_original>
